<compile_context>
chip_gen: v5e
topology: v5e:2x2
jax: 0.10.0
libtpu: 0.0.40
codegen_flags: <defaults>
</compile_context>

<pallas_src>
import functools

import jax
import jax.numpy as jnp
from jax.experimental import pallas as pl
from jax.experimental.pallas import tpu as pltpu


def _token_embed_kernel(ids_ref, tok_hbm_ref, pos_ref, out_ref,
                        gather_buf, copy_sems, *, tq_rows, pos_resident):
    # ids_ref      : (B, T) int32 in SMEM (scalar prefetch)
    # tok_hbm_ref  : (V, D) token embedding table, left in HBM (manual DMA gather)
    # pos_ref      : (T, D) resident table OR (TQ, D) per-tile block (see pos_resident)
    # out_ref      : (TQ, D) output tile of the flat (B*T, D) output
    # gather_buf   : (TQ, D) VMEM scratch for gathered token rows
    # copy_sems    : (TQ,) DMA semaphores
    b = pl.program_id(0)
    t = pl.program_id(1)
    base = pl.multiple_of(t * tq_rows, 8)

    # 1) Issue all token-row gather DMAs (HBM -> VMEM scratch); they overlap.
    copies = []
    for r in range(tq_rows):
        tok_id = ids_ref[b, base + r]
        cp = pltpu.make_async_copy(
            tok_hbm_ref.at[pl.ds(tok_id, 1), :],
            gather_buf.at[pl.ds(r, 1), :],
            copy_sems.at[r],
        )
        cp.start()
        copies.append(cp)

    # 2) Wait on the same descriptors (per-row byte counts match automatically).
    for cp in copies:
        cp.wait()

    # 3) One vectorized add against the positional tile, one dense full-vreg store.
    if pos_resident:
        pos_tile = pos_ref[pl.ds(base, tq_rows), :]
    else:
        pos_tile = pos_ref[...]
    out_ref[...] = (gather_buf[...] + pos_tile).astype(out_ref.dtype)


def token_embedding_forward(token_ids, tok_table, pos_table, *, rows_per_tile=None):
    """Pallas equivalent of TokenEmbedding.forward.

    token_ids: (B, T) integer ids, T must equal context_length (same constraint as
    the PyTorch module, whose positional add requires seq_len == context_length).
    Returns (B, T, D) in the table dtype.
    """
    B, T = token_ids.shape
    V, D = tok_table.shape
    assert pos_table.shape == (T, D)
    assert T % 8 == 0, "context_length must be a multiple of 8 for dense tiles"

    if rows_per_tile is None:
        # Largest divisor of T that is a multiple of 8 and <= 128: big slabs amortize
        # grid-step overhead while keeping the per-step row-DMA / semaphore count modest.
        rows_per_tile = 8
        for cand in range(8, min(T, 128) + 1, 8):
            if T % cand == 0:
                rows_per_tile = cand
    TQ = rows_per_tile
    assert T % TQ == 0 and TQ % 8 == 0
    num_t = T // TQ

    # Keep the whole positional table VMEM-resident (fetched once) when small;
    # otherwise stream per-tile blocks so huge contexts don't blow the VMEM budget.
    pos_bytes = T * D * jnp.dtype(pos_table.dtype).itemsize
    pos_resident = pos_bytes <= (4 << 20)
    if pos_resident:
        pos_spec = pl.BlockSpec((T, D), lambda b, t, ids: (0, 0))
    else:
        pos_spec = pl.BlockSpec((TQ, D), lambda b, t, ids: (t, 0))

    grid_spec = pltpu.PrefetchScalarGridSpec(
        num_scalar_prefetch=1,
        grid=(B, num_t),
        in_specs=[
            # Token embedding table stays in HBM; gathered row-by-row via manual DMA.
            pl.BlockSpec(memory_space=pl.ANY),
            pos_spec,
        ],
        # Flat (B*T, D) output with lane/sublane-dense (TQ, D) blocks.
        out_specs=pl.BlockSpec((TQ, D), lambda b, t, ids: (b * num_t + t, 0)),
        scratch_shapes=[
            pltpu.VMEM((TQ, D), tok_table.dtype),
            pltpu.SemaphoreType.DMA((TQ,)),
        ],
    )

    kernel = functools.partial(_token_embed_kernel, tq_rows=TQ,
                               pos_resident=pos_resident)

    out_flat = pl.pallas_call(
        kernel,
        out_shape=jax.ShapeDtypeStruct((B * T, D), tok_table.dtype),
        grid_spec=grid_spec,
        compiler_params=pltpu.CompilerParams(
            dimension_semantics=("parallel", "parallel")),
    )(token_ids.astype(jnp.int32), tok_table, pos_table)

    return out_flat.reshape(B, T, D)


if __name__ == "__main__":
    # Small, deterministic setup consistent with the module's __init__.
    vocab_size = 64
    output_dim = 128      # lane-aligned embedding dim
    context_length = 8
    batch = 2

    key = jax.random.PRNGKey(0)
    k_tok, k_pos, k_ids = jax.random.split(key, 3)

    # Deterministic synthetic "weights" (nn.Embedding default init is N(0,1)).
    tok_table = jax.random.normal(k_tok, (vocab_size, output_dim), dtype=jnp.float32)
    pos_table = jax.random.normal(k_pos, (context_length, output_dim), dtype=jnp.float32)

    token_ids = jax.random.randint(
        k_ids, (batch, context_length), 0, vocab_size, dtype=jnp.int32)

    out = token_embedding_forward(token_ids, tok_table, pos_table)
    out = jax.block_until_ready(out)

    # Reference check (plain JAX) for the same semantics as the PyTorch forward.
    ref = jnp.take(tok_table, token_ids, axis=0) + pos_table[None, :, :]
    assert out.shape == (batch, context_length, output_dim)
    assert jnp.allclose(out, ref, atol=1e-6), "mismatch vs reference"

    print("KERNEL_OK")
</pallas_src>

<mosaic_0001>
module attributes {stable_mosaic.version = 11 : i64} {
  func.func @_token_embed_kernel(%arg0: i32, %arg1: i32, %arg2: memref<2x8xi32, #tpu.memory_space<smem>>, %arg3: memref<64x128xf32, #tpu.memory_space<any>>, %arg4: memref<8x128xf32, #tpu.memory_space<vmem>>, %arg5: memref<8x128xf32, #tpu.memory_space<vmem>>, %arg6: memref<8x128xf32, #tpu.memory_space<vmem>>, %arg7: memref<8x!tpu.dma_semaphore, #tpu.memory_space<semaphore_mem>>) attributes {dimension_semantics = [#tpu.dimension_semantics<parallel>, #tpu.dimension_semantics<parallel>], iteration_bounds = array<i64: 2, 1>, scalar_prefetch = 1 : i64, scratch_operands = 2 : i64, tpu.core_type = #tpu.core_type<tc>, window_params = [{}, {pipeline_mode = #tpu.pipeline_mode<synchronous>, transform_indices = @transform_1, window_bounds = array<i64: 8, 128>}, {transform_indices = @transform_2, window_bounds = array<i64: 8, 128>}]} {
    %c8_i32 = arith.constant 8 : i32
    %0 = arith.muli %arg1, %c8_i32 : i32
    %1 = tpu.assume_multiple %0, 8 : i32
    %c0_i32 = arith.constant 0 : i32
    %2 = arith.addi %1, %c0_i32 : i32
    %3 = arith.index_cast %arg0 : i32 to index
    %4 = arith.index_cast %2 : i32 to index
    %5 = memref.load %arg2[%3, %4] : memref<2x8xi32, #tpu.memory_space<smem>>
    %c0_i32_0 = arith.constant 0 : i32
    %c0_i32_1 = arith.constant 0 : i32
    %6 = tpu.memref_slice %arg3[%5, %c0_i32_1] : memref<64x128xf32, #tpu.memory_space<any>> -> memref<1x128xf32, #tpu.memory_space<any>>
    %c0_i32_2 = arith.constant 0 : i32
    %c0_i32_3 = arith.constant 0 : i32
    %7 = tpu.memref_slice %arg6[%c0_i32_2, %c0_i32_3] : memref<8x128xf32, #tpu.memory_space<vmem>> -> memref<1x128xf32, #tpu.memory_space<vmem>>
    %8 = tpu.memref_slice %arg7[%c0_i32_0] : memref<8x!tpu.dma_semaphore, #tpu.memory_space<semaphore_mem>> -> memref<1x!tpu.dma_semaphore, #tpu.memory_space<semaphore_mem>>
    %9 = tpu.memref_squeeze %8 : memref<1x!tpu.dma_semaphore, #tpu.memory_space<semaphore_mem>> -> memref<!tpu.dma_semaphore, #tpu.memory_space<semaphore_mem>>
    tpu.enqueue_dma source(%6 : memref<1x128xf32, #tpu.memory_space<any>>) target(%7 : memref<1x128xf32, #tpu.memory_space<vmem>>) target_semaphore(%9 : memref<!tpu.dma_semaphore, #tpu.memory_space<semaphore_mem>>)
    %c1_i32 = arith.constant 1 : i32
    %10 = arith.addi %1, %c1_i32 : i32
    %11 = arith.index_cast %arg0 : i32 to index
    %12 = arith.index_cast %10 : i32 to index
    %13 = memref.load %arg2[%11, %12] : memref<2x8xi32, #tpu.memory_space<smem>>
    %c1_i32_4 = arith.constant 1 : i32
    %c0_i32_5 = arith.constant 0 : i32
    %14 = tpu.memref_slice %arg3[%13, %c0_i32_5] : memref<64x128xf32, #tpu.memory_space<any>> -> memref<1x128xf32, #tpu.memory_space<any>>
    %c1_i32_6 = arith.constant 1 : i32
    %c0_i32_7 = arith.constant 0 : i32
    %15 = tpu.memref_slice %arg6[%c1_i32_6, %c0_i32_7] : memref<8x128xf32, #tpu.memory_space<vmem>> -> memref<1x128xf32, #tpu.memory_space<vmem>>
    %16 = tpu.memref_slice %arg7[%c1_i32_4] : memref<8x!tpu.dma_semaphore, #tpu.memory_space<semaphore_mem>> -> memref<1x!tpu.dma_semaphore, #tpu.memory_space<semaphore_mem>>
    %17 = tpu.memref_squeeze %16 : memref<1x!tpu.dma_semaphore, #tpu.memory_space<semaphore_mem>> -> memref<!tpu.dma_semaphore, #tpu.memory_space<semaphore_mem>>
    tpu.enqueue_dma source(%14 : memref<1x128xf32, #tpu.memory_space<any>>) target(%15 : memref<1x128xf32, #tpu.memory_space<vmem>>) target_semaphore(%17 : memref<!tpu.dma_semaphore, #tpu.memory_space<semaphore_mem>>)
    %c2_i32 = arith.constant 2 : i32
    %18 = arith.addi %1, %c2_i32 : i32
    %19 = arith.index_cast %arg0 : i32 to index
    %20 = arith.index_cast %18 : i32 to index
    %21 = memref.load %arg2[%19, %20] : memref<2x8xi32, #tpu.memory_space<smem>>
    %c2_i32_8 = arith.constant 2 : i32
    %c0_i32_9 = arith.constant 0 : i32
    %22 = tpu.memref_slice %arg3[%21, %c0_i32_9] : memref<64x128xf32, #tpu.memory_space<any>> -> memref<1x128xf32, #tpu.memory_space<any>>
    %c2_i32_10 = arith.constant 2 : i32
    %c0_i32_11 = arith.constant 0 : i32
    %23 = tpu.memref_slice %arg6[%c2_i32_10, %c0_i32_11] : memref<8x128xf32, #tpu.memory_space<vmem>> -> memref<1x128xf32, #tpu.memory_space<vmem>>
    %24 = tpu.memref_slice %arg7[%c2_i32_8] : memref<8x!tpu.dma_semaphore, #tpu.memory_space<semaphore_mem>> -> memref<1x!tpu.dma_semaphore, #tpu.memory_space<semaphore_mem>>
    %25 = tpu.memref_squeeze %24 : memref<1x!tpu.dma_semaphore, #tpu.memory_space<semaphore_mem>> -> memref<!tpu.dma_semaphore, #tpu.memory_space<semaphore_mem>>
    tpu.enqueue_dma source(%22 : memref<1x128xf32, #tpu.memory_space<any>>) target(%23 : memref<1x128xf32, #tpu.memory_space<vmem>>) target_semaphore(%25 : memref<!tpu.dma_semaphore, #tpu.memory_space<semaphore_mem>>)
    %c3_i32 = arith.constant 3 : i32
    %26 = arith.addi %1, %c3_i32 : i32
    %27 = arith.index_cast %arg0 : i32 to index
    %28 = arith.index_cast %26 : i32 to index
    %29 = memref.load %arg2[%27, %28] : memref<2x8xi32, #tpu.memory_space<smem>>
    %c3_i32_12 = arith.constant 3 : i32
    %c0_i32_13 = arith.constant 0 : i32
    %30 = tpu.memref_slice %arg3[%29, %c0_i32_13] : memref<64x128xf32, #tpu.memory_space<any>> -> memref<1x128xf32, #tpu.memory_space<any>>
    %c3_i32_14 = arith.constant 3 : i32
    %c0_i32_15 = arith.constant 0 : i32
    %31 = tpu.memref_slice %arg6[%c3_i32_14, %c0_i32_15] : memref<8x128xf32, #tpu.memory_space<vmem>> -> memref<1x128xf32, #tpu.memory_space<vmem>>
    %32 = tpu.memref_slice %arg7[%c3_i32_12] : memref<8x!tpu.dma_semaphore, #tpu.memory_space<semaphore_mem>> -> memref<1x!tpu.dma_semaphore, #tpu.memory_space<semaphore_mem>>
    %33 = tpu.memref_squeeze %32 : memref<1x!tpu.dma_semaphore, #tpu.memory_space<semaphore_mem>> -> memref<!tpu.dma_semaphore, #tpu.memory_space<semaphore_mem>>
    tpu.enqueue_dma source(%30 : memref<1x128xf32, #tpu.memory_space<any>>) target(%31 : memref<1x128xf32, #tpu.memory_space<vmem>>) target_semaphore(%33 : memref<!tpu.dma_semaphore, #tpu.memory_space<semaphore_mem>>)
    %c4_i32 = arith.constant 4 : i32
    %34 = arith.addi %1, %c4_i32 : i32
    %35 = arith.index_cast %arg0 : i32 to index
    %36 = arith.index_cast %34 : i32 to index
    %37 = memref.load %arg2[%35, %36] : memref<2x8xi32, #tpu.memory_space<smem>>
    %c4_i32_16 = arith.constant 4 : i32
    %c0_i32_17 = arith.constant 0 : i32
    %38 = tpu.memref_slice %arg3[%37, %c0_i32_17] : memref<64x128xf32, #tpu.memory_space<any>> -> memref<1x128xf32, #tpu.memory_space<any>>
    %c4_i32_18 = arith.constant 4 : i32
    %c0_i32_19 = arith.constant 0 : i32
    %39 = tpu.memref_slice %arg6[%c4_i32_18, %c0_i32_19] : memref<8x128xf32, #tpu.memory_space<vmem>> -> memref<1x128xf32, #tpu.memory_space<vmem>>
    %40 = tpu.memref_slice %arg7[%c4_i32_16] : memref<8x!tpu.dma_semaphore, #tpu.memory_space<semaphore_mem>> -> memref<1x!tpu.dma_semaphore, #tpu.memory_space<semaphore_mem>>
    %41 = tpu.memref_squeeze %40 : memref<1x!tpu.dma_semaphore, #tpu.memory_space<semaphore_mem>> -> memref<!tpu.dma_semaphore, #tpu.memory_space<semaphore_mem>>
    tpu.enqueue_dma source(%38 : memref<1x128xf32, #tpu.memory_space<any>>) target(%39 : memref<1x128xf32, #tpu.memory_space<vmem>>) target_semaphore(%41 : memref<!tpu.dma_semaphore, #tpu.memory_space<semaphore_mem>>)
    %c5_i32 = arith.constant 5 : i32
    %42 = arith.addi %1, %c5_i32 : i32
    %43 = arith.index_cast %arg0 : i32 to index
    %44 = arith.index_cast %42 : i32 to index
    %45 = memref.load %arg2[%43, %44] : memref<2x8xi32, #tpu.memory_space<smem>>
    %c5_i32_20 = arith.constant 5 : i32
    %c0_i32_21 = arith.constant 0 : i32
    %46 = tpu.memref_slice %arg3[%45, %c0_i32_21] : memref<64x128xf32, #tpu.memory_space<any>> -> memref<1x128xf32, #tpu.memory_space<any>>
    %c5_i32_22 = arith.constant 5 : i32
    %c0_i32_23 = arith.constant 0 : i32
    %47 = tpu.memref_slice %arg6[%c5_i32_22, %c0_i32_23] : memref<8x128xf32, #tpu.memory_space<vmem>> -> memref<1x128xf32, #tpu.memory_space<vmem>>
    %48 = tpu.memref_slice %arg7[%c5_i32_20] : memref<8x!tpu.dma_semaphore, #tpu.memory_space<semaphore_mem>> -> memref<1x!tpu.dma_semaphore, #tpu.memory_space<semaphore_mem>>
    %49 = tpu.memref_squeeze %48 : memref<1x!tpu.dma_semaphore, #tpu.memory_space<semaphore_mem>> -> memref<!tpu.dma_semaphore, #tpu.memory_space<semaphore_mem>>
    tpu.enqueue_dma source(%46 : memref<1x128xf32, #tpu.memory_space<any>>) target(%47 : memref<1x128xf32, #tpu.memory_space<vmem>>) target_semaphore(%49 : memref<!tpu.dma_semaphore, #tpu.memory_space<semaphore_mem>>)
    %c6_i32 = arith.constant 6 : i32
    %50 = arith.addi %1, %c6_i32 : i32
    %51 = arith.index_cast %arg0 : i32 to index
    %52 = arith.index_cast %50 : i32 to index
    %53 = memref.load %arg2[%51, %52] : memref<2x8xi32, #tpu.memory_space<smem>>
    %c6_i32_24 = arith.constant 6 : i32
    %c0_i32_25 = arith.constant 0 : i32
    %54 = tpu.memref_slice %arg3[%53, %c0_i32_25] : memref<64x128xf32, #tpu.memory_space<any>> -> memref<1x128xf32, #tpu.memory_space<any>>
    %c6_i32_26 = arith.constant 6 : i32
    %c0_i32_27 = arith.constant 0 : i32
    %55 = tpu.memref_slice %arg6[%c6_i32_26, %c0_i32_27] : memref<8x128xf32, #tpu.memory_space<vmem>> -> memref<1x128xf32, #tpu.memory_space<vmem>>
    %56 = tpu.memref_slice %arg7[%c6_i32_24] : memref<8x!tpu.dma_semaphore, #tpu.memory_space<semaphore_mem>> -> memref<1x!tpu.dma_semaphore, #tpu.memory_space<semaphore_mem>>
    %57 = tpu.memref_squeeze %56 : memref<1x!tpu.dma_semaphore, #tpu.memory_space<semaphore_mem>> -> memref<!tpu.dma_semaphore, #tpu.memory_space<semaphore_mem>>
    tpu.enqueue_dma source(%54 : memref<1x128xf32, #tpu.memory_space<any>>) target(%55 : memref<1x128xf32, #tpu.memory_space<vmem>>) target_semaphore(%57 : memref<!tpu.dma_semaphore, #tpu.memory_space<semaphore_mem>>)
    %c7_i32 = arith.constant 7 : i32
    %58 = arith.addi %1, %c7_i32 : i32
    %59 = arith.index_cast %arg0 : i32 to index
    %60 = arith.index_cast %58 : i32 to index
    %61 = memref.load %arg2[%59, %60] : memref<2x8xi32, #tpu.memory_space<smem>>
    %c7_i32_28 = arith.constant 7 : i32
    %c0_i32_29 = arith.constant 0 : i32
    %62 = tpu.memref_slice %arg3[%61, %c0_i32_29] : memref<64x128xf32, #tpu.memory_space<any>> -> memref<1x128xf32, #tpu.memory_space<any>>
    %c7_i32_30 = arith.constant 7 : i32
    %c0_i32_31 = arith.constant 0 : i32
    %63 = tpu.memref_slice %arg6[%c7_i32_30, %c0_i32_31] : memref<8x128xf32, #tpu.memory_space<vmem>> -> memref<1x128xf32, #tpu.memory_space<vmem>>
    %64 = tpu.memref_slice %arg7[%c7_i32_28] : memref<8x!tpu.dma_semaphore, #tpu.memory_space<semaphore_mem>> -> memref<1x!tpu.dma_semaphore, #tpu.memory_space<semaphore_mem>>
    %65 = tpu.memref_squeeze %64 : memref<1x!tpu.dma_semaphore, #tpu.memory_space<semaphore_mem>> -> memref<!tpu.dma_semaphore, #tpu.memory_space<semaphore_mem>>
    tpu.enqueue_dma source(%62 : memref<1x128xf32, #tpu.memory_space<any>>) target(%63 : memref<1x128xf32, #tpu.memory_space<vmem>>) target_semaphore(%65 : memref<!tpu.dma_semaphore, #tpu.memory_space<semaphore_mem>>)
    %c0_i32_32 = arith.constant 0 : i32
    %c0_i32_33 = arith.constant 0 : i32
    %66 = tpu.memref_slice %arg3[%5, %c0_i32_33] : memref<64x128xf32, #tpu.memory_space<any>> -> memref<1x128xf32, #tpu.memory_space<any>>
    %c0_i32_34 = arith.constant 0 : i32
    %c0_i32_35 = arith.constant 0 : i32
    %67 = tpu.memref_slice %arg6[%c0_i32_34, %c0_i32_35] : memref<8x128xf32, #tpu.memory_space<vmem>> -> memref<1x128xf32, #tpu.memory_space<vmem>>
    %68 = tpu.memref_slice %arg7[%c0_i32_32] : memref<8x!tpu.dma_semaphore, #tpu.memory_space<semaphore_mem>> -> memref<1x!tpu.dma_semaphore, #tpu.memory_space<semaphore_mem>>
    %69 = tpu.memref_squeeze %68 : memref<1x!tpu.dma_semaphore, #tpu.memory_space<semaphore_mem>> -> memref<!tpu.dma_semaphore, #tpu.memory_space<semaphore_mem>>
    tpu.wait_dma2 semaphore(%69 : memref<!tpu.dma_semaphore, #tpu.memory_space<semaphore_mem>>) src(%66 : memref<1x128xf32, #tpu.memory_space<any>>) dst(%67 : memref<1x128xf32, #tpu.memory_space<vmem>>)
    %c1_i32_36 = arith.constant 1 : i32
    %c0_i32_37 = arith.constant 0 : i32
    %70 = tpu.memref_slice %arg3[%13, %c0_i32_37] : memref<64x128xf32, #tpu.memory_space<any>> -> memref<1x128xf32, #tpu.memory_space<any>>
    %c1_i32_38 = arith.constant 1 : i32
    %c0_i32_39 = arith.constant 0 : i32
    %71 = tpu.memref_slice %arg6[%c1_i32_38, %c0_i32_39] : memref<8x128xf32, #tpu.memory_space<vmem>> -> memref<1x128xf32, #tpu.memory_space<vmem>>
    %72 = tpu.memref_slice %arg7[%c1_i32_36] : memref<8x!tpu.dma_semaphore, #tpu.memory_space<semaphore_mem>> -> memref<1x!tpu.dma_semaphore, #tpu.memory_space<semaphore_mem>>
    %73 = tpu.memref_squeeze %72 : memref<1x!tpu.dma_semaphore, #tpu.memory_space<semaphore_mem>> -> memref<!tpu.dma_semaphore, #tpu.memory_space<semaphore_mem>>
    tpu.wait_dma2 semaphore(%73 : memref<!tpu.dma_semaphore, #tpu.memory_space<semaphore_mem>>) src(%70 : memref<1x128xf32, #tpu.memory_space<any>>) dst(%71 : memref<1x128xf32, #tpu.memory_space<vmem>>)
    %c2_i32_40 = arith.constant 2 : i32
    %c0_i32_41 = arith.constant 0 : i32
    %74 = tpu.memref_slice %arg3[%21, %c0_i32_41] : memref<64x128xf32, #tpu.memory_space<any>> -> memref<1x128xf32, #tpu.memory_space<any>>
    %c2_i32_42 = arith.constant 2 : i32
    %c0_i32_43 = arith.constant 0 : i32
    %75 = tpu.memref_slice %arg6[%c2_i32_42, %c0_i32_43] : memref<8x128xf32, #tpu.memory_space<vmem>> -> memref<1x128xf32, #tpu.memory_space<vmem>>
    %76 = tpu.memref_slice %arg7[%c2_i32_40] : memref<8x!tpu.dma_semaphore, #tpu.memory_space<semaphore_mem>> -> memref<1x!tpu.dma_semaphore, #tpu.memory_space<semaphore_mem>>
    %77 = tpu.memref_squeeze %76 : memref<1x!tpu.dma_semaphore, #tpu.memory_space<semaphore_mem>> -> memref<!tpu.dma_semaphore, #tpu.memory_space<semaphore_mem>>
    tpu.wait_dma2 semaphore(%77 : memref<!tpu.dma_semaphore, #tpu.memory_space<semaphore_mem>>) src(%74 : memref<1x128xf32, #tpu.memory_space<any>>) dst(%75 : memref<1x128xf32, #tpu.memory_space<vmem>>)
    %c3_i32_44 = arith.constant 3 : i32
    %c0_i32_45 = arith.constant 0 : i32
    %78 = tpu.memref_slice %arg3[%29, %c0_i32_45] : memref<64x128xf32, #tpu.memory_space<any>> -> memref<1x128xf32, #tpu.memory_space<any>>
    %c3_i32_46 = arith.constant 3 : i32
    %c0_i32_47 = arith.constant 0 : i32
    %79 = tpu.memref_slice %arg6[%c3_i32_46, %c0_i32_47] : memref<8x128xf32, #tpu.memory_space<vmem>> -> memref<1x128xf32, #tpu.memory_space<vmem>>
    %80 = tpu.memref_slice %arg7[%c3_i32_44] : memref<8x!tpu.dma_semaphore, #tpu.memory_space<semaphore_mem>> -> memref<1x!tpu.dma_semaphore, #tpu.memory_space<semaphore_mem>>
    %81 = tpu.memref_squeeze %80 : memref<1x!tpu.dma_semaphore, #tpu.memory_space<semaphore_mem>> -> memref<!tpu.dma_semaphore, #tpu.memory_space<semaphore_mem>>
    tpu.wait_dma2 semaphore(%81 : memref<!tpu.dma_semaphore, #tpu.memory_space<semaphore_mem>>) src(%78 : memref<1x128xf32, #tpu.memory_space<any>>) dst(%79 : memref<1x128xf32, #tpu.memory_space<vmem>>)
    %c4_i32_48 = arith.constant 4 : i32
    %c0_i32_49 = arith.constant 0 : i32
    %82 = tpu.memref_slice %arg3[%37, %c0_i32_49] : memref<64x128xf32, #tpu.memory_space<any>> -> memref<1x128xf32, #tpu.memory_space<any>>
    %c4_i32_50 = arith.constant 4 : i32
    %c0_i32_51 = arith.constant 0 : i32
    %83 = tpu.memref_slice %arg6[%c4_i32_50, %c0_i32_51] : memref<8x128xf32, #tpu.memory_space<vmem>> -> memref<1x128xf32, #tpu.memory_space<vmem>>
    %84 = tpu.memref_slice %arg7[%c4_i32_48] : memref<8x!tpu.dma_semaphore, #tpu.memory_space<semaphore_mem>> -> memref<1x!tpu.dma_semaphore, #tpu.memory_space<semaphore_mem>>
    %85 = tpu.memref_squeeze %84 : memref<1x!tpu.dma_semaphore, #tpu.memory_space<semaphore_mem>> -> memref<!tpu.dma_semaphore, #tpu.memory_space<semaphore_mem>>
    tpu.wait_dma2 semaphore(%85 : memref<!tpu.dma_semaphore, #tpu.memory_space<semaphore_mem>>) src(%82 : memref<1x128xf32, #tpu.memory_space<any>>) dst(%83 : memref<1x128xf32, #tpu.memory_space<vmem>>)
    %c5_i32_52 = arith.constant 5 : i32
    %c0_i32_53 = arith.constant 0 : i32
    %86 = tpu.memref_slice %arg3[%45, %c0_i32_53] : memref<64x128xf32, #tpu.memory_space<any>> -> memref<1x128xf32, #tpu.memory_space<any>>
    %c5_i32_54 = arith.constant 5 : i32
    %c0_i32_55 = arith.constant 0 : i32
    %87 = tpu.memref_slice %arg6[%c5_i32_54, %c0_i32_55] : memref<8x128xf32, #tpu.memory_space<vmem>> -> memref<1x128xf32, #tpu.memory_space<vmem>>
    %88 = tpu.memref_slice %arg7[%c5_i32_52] : memref<8x!tpu.dma_semaphore, #tpu.memory_space<semaphore_mem>> -> memref<1x!tpu.dma_semaphore, #tpu.memory_space<semaphore_mem>>
    %89 = tpu.memref_squeeze %88 : memref<1x!tpu.dma_semaphore, #tpu.memory_space<semaphore_mem>> -> memref<!tpu.dma_semaphore, #tpu.memory_space<semaphore_mem>>
    tpu.wait_dma2 semaphore(%89 : memref<!tpu.dma_semaphore, #tpu.memory_space<semaphore_mem>>) src(%86 : memref<1x128xf32, #tpu.memory_space<any>>) dst(%87 : memref<1x128xf32, #tpu.memory_space<vmem>>)
    %c6_i32_56 = arith.constant 6 : i32
    %c0_i32_57 = arith.constant 0 : i32
    %90 = tpu.memref_slice %arg3[%53, %c0_i32_57] : memref<64x128xf32, #tpu.memory_space<any>> -> memref<1x128xf32, #tpu.memory_space<any>>
    %c6_i32_58 = arith.constant 6 : i32
    %c0_i32_59 = arith.constant 0 : i32
    %91 = tpu.memref_slice %arg6[%c6_i32_58, %c0_i32_59] : memref<8x128xf32, #tpu.memory_space<vmem>> -> memref<1x128xf32, #tpu.memory_space<vmem>>
    %92 = tpu.memref_slice %arg7[%c6_i32_56] : memref<8x!tpu.dma_semaphore, #tpu.memory_space<semaphore_mem>> -> memref<1x!tpu.dma_semaphore, #tpu.memory_space<semaphore_mem>>
    %93 = tpu.memref_squeeze %92 : memref<1x!tpu.dma_semaphore, #tpu.memory_space<semaphore_mem>> -> memref<!tpu.dma_semaphore, #tpu.memory_space<semaphore_mem>>
    tpu.wait_dma2 semaphore(%93 : memref<!tpu.dma_semaphore, #tpu.memory_space<semaphore_mem>>) src(%90 : memref<1x128xf32, #tpu.memory_space<any>>) dst(%91 : memref<1x128xf32, #tpu.memory_space<vmem>>)
    %c7_i32_60 = arith.constant 7 : i32
    %c0_i32_61 = arith.constant 0 : i32
    %94 = tpu.memref_slice %arg3[%61, %c0_i32_61] : memref<64x128xf32, #tpu.memory_space<any>> -> memref<1x128xf32, #tpu.memory_space<any>>
    %c7_i32_62 = arith.constant 7 : i32
    %c0_i32_63 = arith.constant 0 : i32
    %95 = tpu.memref_slice %arg6[%c7_i32_62, %c0_i32_63] : memref<8x128xf32, #tpu.memory_space<vmem>> -> memref<1x128xf32, #tpu.memory_space<vmem>>
    %96 = tpu.memref_slice %arg7[%c7_i32_60] : memref<8x!tpu.dma_semaphore, #tpu.memory_space<semaphore_mem>> -> memref<1x!tpu.dma_semaphore, #tpu.memory_space<semaphore_mem>>
    %97 = tpu.memref_squeeze %96 : memref<1x!tpu.dma_semaphore, #tpu.memory_space<semaphore_mem>> -> memref<!tpu.dma_semaphore, #tpu.memory_space<semaphore_mem>>
    tpu.wait_dma2 semaphore(%97 : memref<!tpu.dma_semaphore, #tpu.memory_space<semaphore_mem>>) src(%94 : memref<1x128xf32, #tpu.memory_space<any>>) dst(%95 : memref<1x128xf32, #tpu.memory_space<vmem>>)
    %98 = arith.index_cast %1 : i32 to index
    %c0 = arith.constant 0 : index
    %99 = vector.load %arg4[%98, %c0] : memref<8x128xf32, #tpu.memory_space<vmem>>, vector<8x128xf32>
    %c0_64 = arith.constant 0 : index
    %c0_65 = arith.constant 0 : index
    %100 = vector.load %arg6[%c0_64, %c0_65] : memref<8x128xf32, #tpu.memory_space<vmem>>, vector<8x128xf32>
    %101 = arith.addf %100, %99 : vector<8x128xf32>
    %c0_66 = arith.constant 0 : index
    %c0_67 = arith.constant 0 : index
    %102 = vector.load %arg5[%c0_66, %c0_67] : memref<8x128xf32, #tpu.memory_space<vmem>>, vector<8x128xf32>
    tpu.vector_store %arg5[%c0_66, %c0_67], %101 {strides = array<i32>} : memref<8x128xf32, #tpu.memory_space<vmem>>, vector<8x128xf32>,
    return
  }
  func.func @transform_1(%arg0: i32, %arg1: i32, %arg2: memref<2x8xi32, #tpu.memory_space<smem>>) -> (i32, i32) {
    %c0_i32 = arith.constant 0 : i32
    %c0_i32_0 = arith.constant 0 : i32
    %c0_i32_1 = arith.constant 0 : i32
    return %c0_i32, %c0_i32_0 : i32, i32
  }
  func.func @transform_2(%arg0: i32, %arg1: i32, %arg2: memref<2x8xi32, #tpu.memory_space<smem>>) -> (i32, i32) {
    %c1_i32 = arith.constant 1 : i32
    %0 = arith.muli %arg0, %c1_i32 : i32
    %1 = arith.addi %0, %arg1 : i32
    %c0_i32 = arith.constant 0 : i32
    %c0_i32_0 = arith.constant 0 : i32
    return %1, %c0_i32 : i32, i32
  }
}

</mosaic_0001>

<llo_original>
// kernel: tpu_custom_call.1
$region0: #{tpu_custom_call.1}
  #allocation0 [shape = 'u32[]', space=smem, size = 0x4, offset = 0x4, fixed_abs, tag = 'smem constant byte address 0x4 - core index']
  #allocation1 [shape = 'u32[72,128]{1,0:T(1,128)}', space=vmem, size = 0x9000, scoped, tag = 'internal scratch']
  #allocation2 [shape = 'f32[8,128]{1,0:T(8,128)}', space=vmem, size = 0x1000, scoped, tag = 'scratch operand']
  #allocation3 [shape = 's32[8]{0}', space=sflag, size = 0x20, scoped, tag = 'scratch operand']
  #allocation4 [shape = 's32[1]{0}', space=sflag, size = 0x4, scoped, tag = 'scoped memory for tpu_custom_call.1']
  #allocation5 [shape = 'u8[1024]{0}', space=smem, size = 0x400, scoped, tag = 'prefetched SMEM operand 0']
  #allocation10 [shape = 's32[]', space=sflag, size = 0x4, offset = 0, fixed_abs, tag = 'sflag constant byte address 0x0 - dummy sync flag']
  #allocation11 [shape = 's32[]', space=sflag, size = 0x4, offset = 0, fixed_abs, tag = 'sflag constant byte address 0x0 - dummy sync flag']
  #allocation12 [shape = 'u32[]', space=smem, size = 0x4, offset = 0x44, fixed_abs, tag = 'smem constant byte address 0x44 - assertion arg 0']
  #allocation13 [shape = 'u32[]', space=smem, size = 0x4, offset = 0x48, fixed_abs, tag = 'smem constant byte address 0x48 - assertion arg 1']
  #allocation14 [shape = 's32[]', space=sflag, size = 0x4, offset = 0, fixed_abs, tag = 'sflag constant byte address 0x0 - dummy sync flag']
  #allocation15 [shape = 's32[]', space=sflag, size = 0x4, offset = 0, fixed_abs, tag = 'sflag constant byte address 0x0 - dummy sync flag']
  #allocation16 [shape = 's32[]', space=sflag, size = 0x4, offset = 0, fixed_abs, tag = 'sflag constant byte address 0x0 - dummy sync flag']
  #allocation17 [shape = 's32[]', space=sflag, size = 0x4, offset = 0, fixed_abs, tag = 'sflag constant byte address 0x0 - dummy sync flag']
  #allocation18 [shape = 's32[]', space=sflag, size = 0x4, offset = 0, fixed_abs, tag = 'sflag constant byte address 0x0 - dummy sync flag']
  #allocation19 [shape = 's32[]', space=sflag, size = 0x4, offset = 0, fixed_abs, tag = 'sflag constant byte address 0x0 - dummy sync flag']
  #allocation20 [shape = 's32[]', space=sflag, size = 0x4, offset = 0, fixed_abs, tag = 'sflag constant byte address 0x0 - dummy sync flag']
  #allocation21 [shape = 's32[]', space=sflag, size = 0x4, offset = 0, fixed_abs, tag = 'sflag constant byte address 0x0 - dummy sync flag']
  #allocation22 [shape = 's32[]', space=sflag, size = 0x4, offset = 0, fixed_abs, tag = 'sflag constant byte address 0x0 - dummy sync flag']
  #allocation23 [shape = 's32[]', space=sflag, size = 0x4, offset = 0, fixed_abs, tag = 'sflag constant byte address 0x0 - dummy sync flag']
  #allocation24 [shape = 's32[]', space=sflag, size = 0x4, offset = 0, fixed_abs, tag = 'sflag constant byte address 0x0 - dummy sync flag']
  #allocation25 [shape = 's32[]', space=sflag, size = 0x4, offset = 0, fixed_abs, tag = 'sflag constant byte address 0x0 - dummy sync flag']
  #allocation26 [shape = 's32[]', space=sflag, size = 0x4, offset = 0, fixed_abs, tag = 'sflag constant byte address 0x0 - dummy sync flag']
  #allocation27 [shape = 's32[]', space=sflag, size = 0x4, offset = 0, fixed_abs, tag = 'sflag constant byte address 0x0 - dummy sync flag']
  %s0 = inlined_call_operand.hbm [shape: s32[2,8], index: 0, kind: input, shape index: {}]
  %s1 = inlined_call_operand.hbm [shape: f32[64,128], index: 1, kind: input, shape index: {}]
  %s2 = inlined_call_operand.hbm [shape: f32[8,128], index: 2, kind: input, shape index: {}]
  %s3 = inlined_call_operand.hbm [shape: f32[16,128], index: 3, kind: output, shape index: {}]
  %s4 = sld [smem:[#allocation0]]
  $region73: #{tpu_custom_call.1} parent=0
    _
  %s6 = ssub.s32 1, %s4
  %s7 = scalar_select 0, %s6, %s4
  %s9 = sshll.u32 %s0, 4
  %s10 = int_to_ptr.hbm [resolvable:$true] %s9
  %12 = dma.hbm_to_smem %s10, 32, [#allocation5], [#allocation4]
  %14 = dma.done [#allocation4], 32
  %15 = sfence
  $region1: #{tpu_custom_call.1} parent=0
    #allocation6 [shape = 'u8[4096]{0}', space=vmem, size = 0x1000, scoped, tag = 'input window, operand 2, single buffered']
    #allocation7 [shape = 's32[2]{0}', space=sflag, size = 0x8, scoped, tag = 'scoped memory for tpu_custom_call.1']
    #allocation8 [shape = 's32[2]{0}', space=sflag, size = 0x8, scoped, tag = 'scoped memory for tpu_custom_call.1']
    #allocation9 [shape = 'u8[8192]{0}', space=vmem, size = 0x2000, scoped, tag = 'output window, operand 0']
    %16 = vsyncpa [#allocation7], 0
    %17 = vsyncpa [#allocation8], 0
    %s18 = scalar_lea.sflag [#allocation8], 1
    %19 = vsyncpa %s18, 0
    loop: start=0, step=1, limit=4
    $region2: #{tpu_custom_call.1} parent=1 // loop_pre_header
      _
    $region3: #{tpu_custom_call.1} parent=1 // loop_header
      %s21 = sphi 0, %s25
      %p22 = scmp.ge.s32.totalorder %s21, 4
      %s28 = sphi 0, %s40
      %s29 = sphi 0, %s36
      %s30 = sphi 0, %s28
      %s31 = sphi 0, %s29
      %s32 = sphi 0, %s30
      %s33 = sphi 0, %s31
      %s41 = sphi 0, %s41
      %s43 = sphi 0, %s41
      %s44 = sphi 0, %s43
      %s58 = sphi 0, %s44
      %s66 = sphi 0, %s68
      %s69 = sphi 0, %s66
      %s70 = sphi 0, %s69
      %s86 = sphi 0, %s70
    $region4: #{tpu_custom_call.1} parent=1 // loop_header_branch
      %24 = sbr.rel (%p22) target = $region8
    $region5: #{tpu_custom_call.1} parent=1 // loop_body
      %s26 = ssub.s32 %s21, 1
      %s27 = ssub.s32 %s21, 2
      %s34 = sadd.s32 1, %s29
      %p35 = scmp.ge.s32.totalorder %s34, 1
      %s36 = scalar_select %p35, 0, %s34
      %s37 = sadd.s32 1, %s28
      %s38 = scalar_select %p35, %s37, %s28
      %p39 = scmp.ge.s32.totalorder %s38, 2
      %s40 = scalar_select %p39, 0, %s38
      %s42 = sadd.s32 %s41, 1
      %p45 = scmp.eq.s32.totalorder %s21, 1
      %p46 = scmp.ne.s32.totalorder %s41, %s43
      %p47 = scmp.eq.s32.totalorder %s21, 0
      %p48 = por %p46, %p47
      %p49 = scmp.ne.s32.totalorder %s41, %s43
      %p50 = scmp.eq.s32.totalorder %s26, 1
      %p51 = por %p49, %p50
      %p52 = scmp.ne.s32.totalorder %s43, %s44
      %p53 = scmp.eq.s32.totalorder %s26, 0
      %p54 = por %p52, %p53
      %p55 = scmp.ne.s32.totalorder %s43, %s44
      %p56 = scmp.eq.s32.totalorder %s27, 1
      %p57 = por %p55, %p56
      %p59 = scmp.ne.s32.totalorder %s44, %s58
      %p60 = scmp.eq.s32.totalorder %s27, 0
      %p61 = por %p59, %p60
      %s62 = sadd.s32 %s28, %s29
      %s63 = sadd.s32 %s40, %s36
      %s64 = ssub.s32 %s62, %s63
      %p65 = scmp.eq.s32.totalorder %s64, 0
      %s67 = sadd.s32 %s66, 1
      %s68 = scalar_select %p65, %s66, %s67
      %p71 = pneg %p65
      %p72 = scmp.eq.s32.totalorder %s21, 1
      %p73 = por %p71, %p72
      %p74 = scmp.ne.s32.totalorder %s66, %s69
      %p75 = scmp.eq.s32.totalorder %s21, 0
      %p76 = por %p74, %p75
      %p77 = scmp.ne.s32.totalorder %s66, %s69
      %p78 = scmp.eq.s32.totalorder %s26, 1
      %p79 = por %p77, %p78
      %p80 = scmp.ne.s32.totalorder %s69, %s70
      %p81 = scmp.eq.s32.totalorder %s26, 0
      %p82 = por %p80, %p81
      %p83 = scmp.ne.s32.totalorder %s69, %s70
      %p84 = scmp.eq.s32.totalorder %s27, 1
      %p85 = por %p83, %p84
      %p87 = scmp.ne.s32.totalorder %s70, %s86
      %p88 = scmp.eq.s32.totalorder %s27, 0
      %p89 = por %p87, %p88
      %p90 = scmp.le.s32.totalorder 1, %s21
      %p91 = scmp.lt.s32.totalorder %s21, 3
      %p92 = pnand %p90, %p91
      %p93 = pneg %p92
      // Predicated region
      $region9: #{tpu_custom_call.1} parent=5 // pred_check
        _
      $region10: #{tpu_custom_call.1} parent=5 // pred_check_branch
        %95 = sbr.rel (%p92) target = $region12
      $region11: #{tpu_custom_call.1} parent=5 // pred_region
        %s96 = ssub.s32 %s21, 1
        // Predicated region
        $region13: #{tpu_custom_call.1} parent=11 // pred_check
          %p97 = pneg %p54
        $region14: #{tpu_custom_call.1} parent=11 // pred_check_branch
          %99 = sbr.rel (%p97) target = $region16
        $region15: #{tpu_custom_call.1} parent=11 // pred_region
          %101 = vsyncadd [#allocation7], 0
          %s103 = sshll.u32 %s2, 4
          %s104 = int_to_ptr.hbm [resolvable:$true] %s103
          %s105 = sshll.u32 [#allocation6], 4
          %s106 = int_to_ptr.vmem [resolvable:$true] %s105
          %108 = dma.hbm_to_vmem [thread:$0]  %s104, 128, %s106, [#allocation7]
        $region16: #{tpu_custom_call.1} parent=11 // pred_fallthru
          _
      $region12: #{tpu_custom_call.1} parent=5 // pred_fallthru
        _
      %p109 = scmp.lt.s32.totalorder %s21, 2
      // Predicated region
      $region17: #{tpu_custom_call.1} parent=5 // pred_check
        %p110 = pneg %p109
      $region18: #{tpu_custom_call.1} parent=5 // pred_check_branch
        %112 = sbr.rel (%p110) target = $region20
      $region19: #{tpu_custom_call.1} parent=5 // pred_region
        _
      $region20: #{tpu_custom_call.1} parent=5 // pred_fallthru
        _
      %p113 = scmp.le.s32.totalorder 1, %s21
      %p114 = scmp.lt.s32.totalorder %s21, 3
      %p115 = pnand %p113, %p114
      %p116 = pneg %p115
      // Predicated region
      $region21: #{tpu_custom_call.1} parent=5 // pred_check
        _
      $region22: #{tpu_custom_call.1} parent=5 // pred_check_branch
        %118 = sbr.rel (%p115) target = $region24
      $region23: #{tpu_custom_call.1} parent=5 // pred_region
        %s119 = ssub.s32 %s21, 1
        // Predicated region
        $region25: #{tpu_custom_call.1} parent=23 // pred_check
          %p120 = pneg %p54
        $region26: #{tpu_custom_call.1} parent=23 // pred_check_branch
          %122 = sbr.rel (%p120) target = $region28
        $region27: #{tpu_custom_call.1} parent=23 // pred_region
          %124 = dma.done [#allocation7], 128
        $region28: #{tpu_custom_call.1} parent=23 // pred_fallthru
          _
        %p125 = pneg %p54
        %p126 = pneg %p51
        %p127 = pneg %p82
        %p128 = pneg %p79
        %s129 = sand.u32 %s69, 1
        %s130 = scalar_lea.sflag [#allocation8], %s129
        %s131 = sand.u32 %s69, 1
        %s132 = smul.addr %s131, 8
        %s133 = scalar_lea.vmem [#allocation9], %s132
        %s134 = sadd.s32 %s30, %s31
        %s135 = smul.u32 %s31, 8
        %s136 = sshra.s32 %s135, 7
        %s137 = sand.u32 %s135, 127
        %s138 = sadd.s32 %s136, %s30
        %s139 = smul.u32 %s138, 128
        %s140 = sshra.s32 %s135, 7
        %s141 = sand.u32 %s135, 127
        %s142 = sadd.s32 %s139, %s141
        %s143 = sld [smem:[#allocation5 + %s142]]
        %s144 = scalar_lea.hbm %s1, %s143
        // Predicated region
        $region29: #{tpu_custom_call.1} parent=23 // pred_check
          _
        $region30: #{tpu_custom_call.1} parent=23 // pred_check_branch
          %146 = sbr.rel target = $region32
        $region31: #{tpu_custom_call.1} parent=23 // pred_region
          %147 = sst [smem:[#allocation12]] [#allocation11]
          %148 = sst [smem:[#allocation13]] [#allocation10]
        $region32: #{tpu_custom_call.1} parent=23 // pred_fallthru
          _
        %150 = shalt.err (0)
        %s152 = sshll.u32 %s144, 4
        %s153 = int_to_ptr.hbm [resolvable:$true] %s152
        %s154 = sshll.u32 [#allocation2], 4
        %s155 = int_to_ptr.vmem [resolvable:$true] %s154
        %157 = dma.hbm_to_vmem [thread:$0]  %s153, 16, %s155, [#allocation3]
        %s158 = sadd.s32 %s135, 1
        %s159 = sshra.s32 %s158, 7
        %s160 = sand.u32 %s158, 127
        %s161 = sadd.s32 %s159, %s30
        %s162 = smul.u32 %s161, 128
        %s163 = sshra.s32 %s158, 7
        %s164 = sand.u32 %s158, 127
        %s165 = sadd.s32 %s162, %s164
        %s166 = sld [smem:[#allocation5 + %s165]]
        %s167 = scalar_lea.hbm %s1, %s166
        %s168 = scalar_lea.vmem [#allocation2], 1
        %s169 = scalar_lea.sflag [#allocation3], 1
        // Predicated region
        $region33: #{tpu_custom_call.1} parent=23 // pred_check
          _
        $region34: #{tpu_custom_call.1} parent=23 // pred_check_branch
          %171 = sbr.rel target = $region36
        $region35: #{tpu_custom_call.1} parent=23 // pred_region
          %172 = sst [smem:[#allocation12]] [#allocation15]
          %173 = sst [smem:[#allocation13]] [#allocation14]
        $region36: #{tpu_custom_call.1} parent=23 // pred_fallthru
          _
        %175 = shalt.err (0)
        %s177 = sshll.u32 %s167, 4
        %s178 = int_to_ptr.hbm [resolvable:$true] %s177
        %s179 = sshll.u32 %s168, 4
        %s180 = int_to_ptr.vmem [resolvable:$true] %s179
        %182 = dma.hbm_to_vmem [thread:$0]  %s178, 16, %s180, %s169
        %s183 = sadd.s32 %s135, 2
        %s184 = sshra.s32 %s183, 7
        %s185 = sand.u32 %s183, 127
        %s186 = sadd.s32 %s184, %s30
        %s187 = smul.u32 %s186, 128
        %s188 = sshra.s32 %s183, 7
        %s189 = sand.u32 %s183, 127
        %s190 = sadd.s32 %s187, %s189
        %s191 = sld [smem:[#allocation5 + %s190]]
        %s192 = scalar_lea.hbm %s1, %s191
        %s193 = scalar_lea.vmem [#allocation2], 2
        %s194 = scalar_lea.sflag [#allocation3], 2
        // Predicated region
        $region37: #{tpu_custom_call.1} parent=23 // pred_check
          _
        $region38: #{tpu_custom_call.1} parent=23 // pred_check_branch
          %196 = sbr.rel target = $region40
        $region39: #{tpu_custom_call.1} parent=23 // pred_region
          %197 = sst [smem:[#allocation12]] [#allocation17]
          %198 = sst [smem:[#allocation13]] [#allocation16]
        $region40: #{tpu_custom_call.1} parent=23 // pred_fallthru
          _
        %200 = shalt.err (0)
        %s202 = sshll.u32 %s192, 4
        %s203 = int_to_ptr.hbm [resolvable:$true] %s202
        %s204 = sshll.u32 %s193, 4
        %s205 = int_to_ptr.vmem [resolvable:$true] %s204
        %207 = dma.hbm_to_vmem [thread:$0]  %s203, 16, %s205, %s194
        %s208 = sadd.s32 %s135, 3
        %s209 = sshra.s32 %s208, 7
        %s210 = sand.u32 %s208, 127
        %s211 = sadd.s32 %s209, %s30
        %s212 = smul.u32 %s211, 128
        %s213 = sshra.s32 %s208, 7
        %s214 = sand.u32 %s208, 127
        %s215 = sadd.s32 %s212, %s214
        %s216 = sld [smem:[#allocation5 + %s215]]
        %s217 = scalar_lea.hbm %s1, %s216
        %s218 = scalar_lea.vmem [#allocation2], 3
        %s219 = scalar_lea.sflag [#allocation3], 3
        // Predicated region
        $region41: #{tpu_custom_call.1} parent=23 // pred_check
          _
        $region42: #{tpu_custom_call.1} parent=23 // pred_check_branch
          %221 = sbr.rel target = $region44
        $region43: #{tpu_custom_call.1} parent=23 // pred_region
          %222 = sst [smem:[#allocation12]] [#allocation19]
          %223 = sst [smem:[#allocation13]] [#allocation18]
        $region44: #{tpu_custom_call.1} parent=23 // pred_fallthru
          _
        %225 = shalt.err (0)
        %s227 = sshll.u32 %s217, 4
        %s228 = int_to_ptr.hbm [resolvable:$true] %s227
        %s229 = sshll.u32 %s218, 4
        %s230 = int_to_ptr.vmem [resolvable:$true] %s229
        %232 = dma.hbm_to_vmem [thread:$0]  %s228, 16, %s230, %s219
        %s233 = sadd.s32 %s135, 4
        %s234 = sshra.s32 %s233, 7
        %s235 = sand.u32 %s233, 127
        %s236 = sadd.s32 %s234, %s30
        %s237 = smul.u32 %s236, 128
        %s238 = sshra.s32 %s233, 7
        %s239 = sand.u32 %s233, 127
        %s240 = sadd.s32 %s237, %s239
        %s241 = sld [smem:[#allocation5 + %s240]]
        %s242 = scalar_lea.hbm %s1, %s241
        %s243 = scalar_lea.vmem [#allocation2], 4
        %s244 = scalar_lea.sflag [#allocation3], 4
        // Predicated region
        $region45: #{tpu_custom_call.1} parent=23 // pred_check
          _
        $region46: #{tpu_custom_call.1} parent=23 // pred_check_branch
          %246 = sbr.rel target = $region48
        $region47: #{tpu_custom_call.1} parent=23 // pred_region
          %247 = sst [smem:[#allocation12]] [#allocation21]
          %248 = sst [smem:[#allocation13]] [#allocation20]
        $region48: #{tpu_custom_call.1} parent=23 // pred_fallthru
          _
        %250 = shalt.err (0)
        %s252 = sshll.u32 %s242, 4
        %s253 = int_to_ptr.hbm [resolvable:$true] %s252
        %s254 = sshll.u32 %s243, 4
        %s255 = int_to_ptr.vmem [resolvable:$true] %s254
        %257 = dma.hbm_to_vmem [thread:$0]  %s253, 16, %s255, %s244
        %s258 = sadd.s32 %s135, 5
        %s259 = sshra.s32 %s258, 7
        %s260 = sand.u32 %s258, 127
        %s261 = sadd.s32 %s259, %s30
        %s262 = smul.u32 %s261, 128
        %s263 = sshra.s32 %s258, 7
        %s264 = sand.u32 %s258, 127
        %s265 = sadd.s32 %s262, %s264
        %s266 = sld [smem:[#allocation5 + %s265]]
        %s267 = scalar_lea.hbm %s1, %s266
        %s268 = scalar_lea.vmem [#allocation2], 5
        %s269 = scalar_lea.sflag [#allocation3], 5
        // Predicated region
        $region49: #{tpu_custom_call.1} parent=23 // pred_check
          _
        $region50: #{tpu_custom_call.1} parent=23 // pred_check_branch
          %271 = sbr.rel target = $region52
        $region51: #{tpu_custom_call.1} parent=23 // pred_region
          %272 = sst [smem:[#allocation12]] [#allocation23]
          %273 = sst [smem:[#allocation13]] [#allocation22]
        $region52: #{tpu_custom_call.1} parent=23 // pred_fallthru
          _
        %275 = shalt.err (0)
        %s277 = sshll.u32 %s267, 4
        %s278 = int_to_ptr.hbm [resolvable:$true] %s277
        %s279 = sshll.u32 %s268, 4
        %s280 = int_to_ptr.vmem [resolvable:$true] %s279
        %282 = dma.hbm_to_vmem [thread:$0]  %s278, 16, %s280, %s269
        %s283 = sadd.s32 %s135, 6
        %s284 = sshra.s32 %s283, 7
        %s285 = sand.u32 %s283, 127
        %s286 = sadd.s32 %s284, %s30
        %s287 = smul.u32 %s286, 128
        %s288 = sshra.s32 %s283, 7
        %s289 = sand.u32 %s283, 127
        %s290 = sadd.s32 %s287, %s289
        %s291 = sld [smem:[#allocation5 + %s290]]
        %s292 = scalar_lea.hbm %s1, %s291
        %s293 = scalar_lea.vmem [#allocation2], 6
        %s294 = scalar_lea.sflag [#allocation3], 6
        // Predicated region
        $region53: #{tpu_custom_call.1} parent=23 // pred_check
          _
        $region54: #{tpu_custom_call.1} parent=23 // pred_check_branch
          %296 = sbr.rel target = $region56
        $region55: #{tpu_custom_call.1} parent=23 // pred_region
          %297 = sst [smem:[#allocation12]] [#allocation25]
          %298 = sst [smem:[#allocation13]] [#allocation24]
        $region56: #{tpu_custom_call.1} parent=23 // pred_fallthru
          _
        %300 = shalt.err (0)
        %s302 = sshll.u32 %s292, 4
        %s303 = int_to_ptr.hbm [resolvable:$true] %s302
        %s304 = sshll.u32 %s293, 4
        %s305 = int_to_ptr.vmem [resolvable:$true] %s304
        %307 = dma.hbm_to_vmem [thread:$0]  %s303, 16, %s305, %s294
        %s308 = sadd.s32 %s135, 7
        %s309 = sshra.s32 %s308, 7
        %s310 = sand.u32 %s308, 127
        %s311 = sadd.s32 %s309, %s30
        %s312 = smul.u32 %s311, 128
        %s313 = sshra.s32 %s308, 7
        %s314 = sand.u32 %s308, 127
        %s315 = sadd.s32 %s312, %s314
        %s316 = sld [smem:[#allocation5 + %s315]]
        %s317 = scalar_lea.hbm %s1, %s316
        %s318 = scalar_lea.vmem [#allocation2], 7
        %s319 = scalar_lea.sflag [#allocation3], 7
        // Predicated region
        $region57: #{tpu_custom_call.1} parent=23 // pred_check
          _
        $region58: #{tpu_custom_call.1} parent=23 // pred_check_branch
          %321 = sbr.rel target = $region60
        $region59: #{tpu_custom_call.1} parent=23 // pred_region
          %322 = sst [smem:[#allocation12]] [#allocation27]
          %323 = sst [smem:[#allocation13]] [#allocation26]
        $region60: #{tpu_custom_call.1} parent=23 // pred_fallthru
          _
        %325 = shalt.err (0)
        %s327 = sshll.u32 %s317, 4
        %s328 = int_to_ptr.hbm [resolvable:$true] %s327
        %s329 = sshll.u32 %s318, 4
        %s330 = int_to_ptr.vmem [resolvable:$true] %s329
        %332 = dma.hbm_to_vmem [thread:$0]  %s328, 16, %s330, %s319
        %s333 = smul.u32 1, 1
        %s334 = sshll.u32 %s333, 4
        %335 = dma.done [#allocation3], %s334
        %s336 = sshll.u32 %s333, 4
        %337 = dma.done %s169, %s336
        %s338 = sshll.u32 %s333, 4
        %339 = dma.done %s194, %s338
        %s340 = sshll.u32 %s333, 4
        %341 = dma.done %s219, %s340
        %s342 = sshll.u32 %s333, 4
        %343 = dma.done %s244, %s342
        %s344 = sshll.u32 %s333, 4
        %345 = dma.done %s269, %s344
        %s346 = sshll.u32 %s333, 4
        %347 = dma.done %s294, %s346
        %s348 = sshll.u32 %s333, 4
        %349 = dma.done %s319, %s348
        %s350 = scalar_lea.vmem [#allocation6], %s135
        %v351 = vld [vmem:[%s350] sm:$0xff]
        %v352 = vld [vmem:[#allocation2] sm:$0xff]
        %v353 = vadd.f32 %v352, %v351
        %354 = vst [vmem:[%s133] sm:$0xff] %v353
        %s355 = sand.u32 %s69, 1
        %s356 = scalar_lea.sflag [#allocation8], %s355
        %s357 = sand.u32 %s69, 1
        %s358 = smul.addr %s357, 8
        %s359 = scalar_lea.vmem [#allocation9], %s358
        // Predicated region
        $region61: #{tpu_custom_call.1} parent=23 // pred_check
          %p360 = pneg %p79
        $region62: #{tpu_custom_call.1} parent=23 // pred_check_branch
          %362 = sbr.rel (%p360) target = $region64
        $region63: #{tpu_custom_call.1} parent=23 // pred_region
          %s363 = sadd.s32 %s30, %s31
          %365 = vsyncadd %s356, 0
          %s366 = smul.addr %s363, 8
          %s367 = scalar_lea.hbm %s3, %s366
          %s369 = sshll.u32 %s359, 4
          %s370 = int_to_ptr.vmem [resolvable:$true] %s369
          %s371 = sshll.u32 %s367, 4
          %s372 = int_to_ptr.hbm [resolvable:$true] %s371
          %374 = dma.vmem_to_hbm [thread:$0]  %s370, 128, %s372, %s356
        $region64: #{tpu_custom_call.1} parent=23 // pred_fallthru
          _
      $region24: #{tpu_custom_call.1} parent=5 // pred_fallthru
        _
      %p375 = scmp.le.s32.totalorder 2, %s21
      // Predicated region
      $region65: #{tpu_custom_call.1} parent=5 // pred_check
        %p376 = pneg %p375
      $region66: #{tpu_custom_call.1} parent=5 // pred_check_branch
        %378 = sbr.rel (%p376) target = $region68
      $region67: #{tpu_custom_call.1} parent=5 // pred_region
        %s379 = ssub.s32 %s21, 2
        // Predicated region
        $region69: #{tpu_custom_call.1} parent=67 // pred_check
          %p380 = pneg %p85
        $region70: #{tpu_custom_call.1} parent=67 // pred_check_branch
          %382 = sbr.rel (%p380) target = $region72
        $region71: #{tpu_custom_call.1} parent=67 // pred_region
          %s383 = sand.u32 %s70, 1
          %s384 = scalar_lea.sflag [#allocation8], %s383
          %s385 = sand.u32 %s70, 1
          %s386 = smul.addr %s385, 8
          %s387 = scalar_lea.vmem [#allocation9], %s386
          %389 = dma.done %s384, 128
        $region72: #{tpu_custom_call.1} parent=67 // pred_fallthru
          _
      $region68: #{tpu_custom_call.1} parent=5 // pred_fallthru
        _
    $region6: #{tpu_custom_call.1} parent=1 // loop_footer
      %s25 = sadd.s32 1, %s21
    $region7: #{tpu_custom_call.1} parent=1 // loop_footer_branch
      %20 = sbr.rel target = $region3
    $region8: #{tpu_custom_call.1} parent=1 // loop_exit
      _
    %390 = vsyncpa [#allocation7], 1
    %s391 = scalar_lea.sflag [#allocation7], 1
    %392 = vsyncpa %s391, 1
    %393 = vsyncpa [#allocation8], 1
    %s394 = scalar_lea.sflag [#allocation8], 1
    %395 = vsyncpa %s394, 1
  %396 = vsyncmov [#allocation3]
  %s397 = vpop.sfrf %396
  %p398 = scmp.eq.s32.totalorder %s397, 0
  %p399 = pneg %p398
  %401 = shalt.err (%p399)
  %s402 = scalar_lea.sflag [#allocation3], 1
  %403 = vsyncmov %s402
  %s404 = vpop.sfrf %403
  %p405 = scmp.eq.s32.totalorder %s404, 0
  %p406 = pneg %p405
  %408 = shalt.err (%p406)
  %s409 = scalar_lea.sflag [#allocation3], 2
  %410 = vsyncmov %s409
  %s411 = vpop.sfrf %410
  %p412 = scmp.eq.s32.totalorder %s411, 0
  %p413 = pneg %p412
  %415 = shalt.err (%p413)
  %s416 = scalar_lea.sflag [#allocation3], 3
  %417 = vsyncmov %s416
  %s418 = vpop.sfrf %417
  %p419 = scmp.eq.s32.totalorder %s418, 0
  %p420 = pneg %p419
  %422 = shalt.err (%p420)
  %s423 = scalar_lea.sflag [#allocation3], 4
  %424 = vsyncmov %s423
  %s425 = vpop.sfrf %424
  %p426 = scmp.eq.s32.totalorder %s425, 0
  %p427 = pneg %p426
  %429 = shalt.err (%p427)
  %s430 = scalar_lea.sflag [#allocation3], 5
  %431 = vsyncmov %s430
  %s432 = vpop.sfrf %431
  %p433 = scmp.eq.s32.totalorder %s432, 0
  %p434 = pneg %p433
  %436 = shalt.err (%p434)
  %s437 = scalar_lea.sflag [#allocation3], 6
  %438 = vsyncmov %s437
  %s439 = vpop.sfrf %438
  %p440 = scmp.eq.s32.totalorder %s439, 0
  %p441 = pneg %p440
  %443 = shalt.err (%p441)
  %s444 = scalar_lea.sflag [#allocation3], 7
  %445 = vsyncmov %s444
  %s446 = vpop.sfrf %445
  %p447 = scmp.eq.s32.totalorder %s446, 0
  %p448 = pneg %p447
  %450 = shalt.err (%p448)

</llo_original>
